<compile_context>
chip_gen: v6e
topology: v6e:2x2x1
jax: 0.10.0
libtpu: 0.0.40
codegen_flags: <defaults>
</compile_context>

<pallas_src>
import functools

import jax
import jax.numpy as jnp
from jax.experimental import pallas as pl
from jax.experimental.pallas import tpu as pltpu


def _round_up(x, m):
    return (x + m - 1) // m * m


# --------------------------------------------------------------------------
# Kernels
# --------------------------------------------------------------------------
def _expert_net_kernel_resident(x_ref, w1_ref, b1_ref, w2_ref, b2_ref, o_ref):
    """Whole-K fused forward for one (tm, N_pad) output tile. grid = (M tiles,)."""
    h = jnp.dot(x_ref[...], w1_ref[...], preferred_element_type=jnp.float32)
    h = jnp.maximum(h + b1_ref[...], 0.0)            # Linear1 + ReLU (Dropout = id)
    y = jnp.dot(h.astype(w2_ref.dtype), w2_ref[...],
                preferred_element_type=jnp.float32) + b2_ref[...]
    o_ref[...] = jnp.maximum(y, 0.0).astype(o_ref.dtype)   # Linear2 + ReLU (Dropout = id)


def _expert_net_kernel_ktiled(x_ref, w1_ref, b1_ref, w2_ref, b2_ref, o_ref, h_acc):
    """Fallback for very large feature_dim. grid = (M tiles [parallel], K tiles [arbitrary])."""
    k = pl.program_id(1)

    @pl.when(k == 0)
    def _():
        h_acc[...] = jnp.zeros_like(h_acc)

    h_acc[...] += jnp.dot(x_ref[...], w1_ref[...], preferred_element_type=jnp.float32)

    @pl.when(k == pl.num_programs(1) - 1)
    def _():
        h = jnp.maximum(h_acc[...] + b1_ref[...], 0.0)
        y = jnp.dot(h.astype(w2_ref.dtype), w2_ref[...],
                    preferred_element_type=jnp.float32) + b2_ref[...]
        o_ref[...] = jnp.maximum(y, 0.0).astype(o_ref.dtype)


# --------------------------------------------------------------------------
# Wrapper
# --------------------------------------------------------------------------
def expert_net_forward(params, x, *, tm_max=512, tk_max=2048,
                       use_bf16=False, out_dtype=None, out_padded=False):
    """out = relu(relu(x @ W1 + b1) @ W2 + b2); x: (..., feature_dim).

    use_bf16:  cast x/W1/W2 to bf16 for the MXU (f32 accumulation/epilogue kept).
    out_padded: return the lane-dense (M_pad, N_pad) slab (skip the slice/reshape).
    """
    w1, b1, w2, b2 = params["w1"], params["b1"], params["w2"], params["b2"]
    orig_shape = x.shape
    K = orig_shape[-1]
    M = 1
    for d in orig_shape[:-1]:
        M *= d
    H = w1.shape[1]
    N = w2.shape[1]
    assert w1.shape[0] == K and w2.shape[0] == H
    assert b1.shape == (H,) and b2.shape == (N,)

    mm_dtype = jnp.bfloat16 if use_bf16 else jnp.float32
    out_dtype = x.dtype if out_dtype is None else out_dtype
    in_bytes = jnp.dtype(mm_dtype).itemsize
    out_bytes = jnp.dtype(out_dtype).itemsize

    # Lane-dense padding: x's K and the output's N to multiples of 128; hidden H
    # (=64) is left unpadded (block last dim == full array dim satisfies (8,128)).
    K_pad = _round_up(K, 128)
    N_pad = _round_up(N, 128)
    M_pad = _round_up(max(M, 1), 8)

    # Generation-aware VMEM budget (v7x: 64 MiB physical / 32 MiB default scoped;
    # v5e/v6e: 128 MiB physical).
    try:
        vmem_cap = int(pltpu.get_tpu_info().vmem_capacity_bytes)
    except Exception:
        vmem_cap = 64 << 20          # conservative (v7x per-core VMEM)
    vmem_limit = min(vmem_cap * 3 // 4, 112 << 20)
    budget = vmem_limit - (2 << 20)  # headroom for compiler-internal scratch

    # --- M tile: big, but keep >= 2 tiles so both v7x TensorCores get work. ---
    tm = min(tm_max, M_pad)
    if M_pad >= 16 and tm > M_pad // 2:
        tm = max(8, _round_up(M_pad // 2, 8))

    def _resident_vmem(tm_):
        return (2 * tm_ * K_pad * in_bytes          # x slab, double-buffered
                + 2 * tm_ * N_pad * out_bytes       # output tile, double-buffered
                + 2 * K_pad * H * in_bytes          # W1 (resident)
                + 2 * H * N_pad * in_bytes          # W2 (resident)
                + 2 * (H + N_pad) * 4               # biases
                + 2 * tm_ * H * 4)                  # f32 hidden activations

    use_k_grid = False
    while tm > 8 and _resident_vmem(tm) > budget:
        tm = max(8, _round_up(tm // 2, 8))
    if _resident_vmem(tm) > budget:
        use_k_grid = True

    tk = K_pad
    if use_k_grid:
        tk = min(tk_max, K_pad)

        def _tiled_vmem(tm_, tk_):
            return (3 * tm_ * tk_ * in_bytes        # x tile, Buffered(3)
                    + 3 * tk_ * H * in_bytes        # W1 K-slab, Buffered(3)
                    + 2 * tm_ * N_pad * out_bytes
                    + 2 * H * N_pad * in_bytes
                    + 2 * (H + N_pad) * 4
                    + tm_ * H * 4)                  # h_acc scratch

        while tk > 128 and _tiled_vmem(tm, tk) > budget:
            tk = _round_up(max(128, tk // 2), 128)
        while tm > 8 and _tiled_vmem(tm, tk) > budget:
            tm = max(8, _round_up(tm // 2, 8))
        K_pad = _round_up(K_pad, tk)

    M_pad = _round_up(M_pad, tm)

    # --- Operand prep (single cast; skip the extra HBM pad pass when aligned). ---
    # TODO(synk): weight/bias padding below could be hoisted to a one-time
    # param-prep step outside the jitted hot path (it is tiny relative to x).
    x2 = x.reshape(M, K)
    if x2.dtype != mm_dtype:
        x2 = x2.astype(mm_dtype)
    if M_pad != M or K_pad != K:
        xp = jnp.zeros((M_pad, K_pad), mm_dtype).at[:M, :K].set(x2)
    else:
        xp = x2

    w1c = w1.astype(mm_dtype)
    w1p = (jnp.zeros((K_pad, H), mm_dtype).at[:K, :].set(w1c)
           if K_pad != K else w1c)
    b1p = b1.astype(jnp.float32).reshape(1, H)
    w2c = w2.astype(mm_dtype)
    w2p = (jnp.zeros((H, N_pad), mm_dtype).at[:, :N].set(w2c)
           if N_pad != N else w2c)
    b2p = (jnp.zeros((1, N_pad), jnp.float32).at[0, :N].set(b2.astype(jnp.float32))
           if N_pad != N else b2.astype(jnp.float32).reshape(1, N))

    compiler_params = pltpu.CompilerParams(
        dimension_semantics=("parallel", "arbitrary") if use_k_grid else ("parallel",),
        vmem_limit_bytes=int(vmem_limit),
    )

    if not use_k_grid:
        out = pl.pallas_call(
            _expert_net_kernel_resident,
            out_shape=jax.ShapeDtypeStruct((M_pad, N_pad), out_dtype),
            grid=(M_pad // tm,),
            in_specs=[
                pl.BlockSpec((tm, K_pad), lambda i: (i, 0)),     # x slab (streamed)
                pl.BlockSpec((K_pad, H), lambda i: (0, 0)),      # W1 (resident)
                pl.BlockSpec((1, H), lambda i: (0, 0)),          # b1
                pl.BlockSpec((H, N_pad), lambda i: (0, 0)),      # W2 (resident)
                pl.BlockSpec((1, N_pad), lambda i: (0, 0)),      # b2
            ],
            out_specs=pl.BlockSpec((tm, N_pad), lambda i: (i, 0)),
            compiler_params=compiler_params,
        )(xp, w1p, b1p, w2p, b2p)
    else:
        out = pl.pallas_call(
            _expert_net_kernel_ktiled,
            out_shape=jax.ShapeDtypeStruct((M_pad, N_pad), out_dtype),
            grid=(M_pad // tm, K_pad // tk),
            in_specs=[
                pl.BlockSpec((tm, tk), lambda i, k: (i, k),
                             pipeline_mode=pl.Buffered(3)),       # x tile
                pl.BlockSpec((tk, H), lambda i, k: (k, 0),
                             pipeline_mode=pl.Buffered(3)),       # W1 K-slab
                pl.BlockSpec((1, H), lambda i, k: (0, 0)),        # b1
                pl.BlockSpec((H, N_pad), lambda i, k: (0, 0)),    # W2
                pl.BlockSpec((1, N_pad), lambda i, k: (0, 0)),    # b2
            ],
            out_specs=pl.BlockSpec((tm, N_pad), lambda i, k: (i, 0)),
            scratch_shapes=[pltpu.VMEM((tm, H), jnp.float32)],
            compiler_params=compiler_params,
        )(xp, w1p, b1p, w2p, b2p)

    if out_padded:
        return out                                   # (M_pad, N_pad) lane-dense slab
    if M_pad != M or N_pad != N:
        out = out[:M, :N]
    return out.reshape(*orig_shape[:-1], N)


# --------------------------------------------------------------------------
# Self-test
# --------------------------------------------------------------------------
if __name__ == "__main__":
    # Small shapes consistent with the module: x's leading (batch, seq) dims are
    # batch for nn.Linear; hidden=64 is fixed by the module.
    batch, seq = 2, 8
    feature_dim = 16
    hidden = 64
    expert_dim = 32

    key = jax.random.PRNGKey(0)
    k_x, k_w1, k_b1, k_w2, k_b2 = jax.random.split(key, 5)
    x = jax.random.normal(k_x, (batch, seq, feature_dim), jnp.float32)
    params = {
        "w1": jax.random.normal(k_w1, (feature_dim, hidden), jnp.float32) * 0.1,
        "b1": jax.random.normal(k_b1, (hidden,), jnp.float32) * 0.01,
        "w2": jax.random.normal(k_w2, (hidden, expert_dim), jnp.float32) * 0.1,
        "b2": jax.random.normal(k_b2, (expert_dim,), jnp.float32) * 0.01,
    }

    # Pure-JAX reference (eval mode: Dropout = identity).
    h_ref = jnp.maximum(x @ params["w1"] + params["b1"], 0.0)
    ref = jnp.maximum(h_ref @ params["w2"] + params["b2"], 0.0)

    # f32 path (exact vs reference).
    fwd_f32 = jax.jit(functools.partial(expert_net_forward, use_bf16=False))
    out = fwd_f32(params, x)
    jax.block_until_ready(out)
    assert out.shape == (batch, seq, expert_dim), out.shape
    assert bool(jnp.all(jnp.isfinite(out)))
    assert bool(jnp.allclose(out, ref, atol=1e-5, rtol=1e-5)), \
        float(jnp.max(jnp.abs(out - ref)))

    # bf16-operand path (MXU-native on v6e/v7x; f32 accumulation) -- loose check.
    fwd_bf16 = jax.jit(functools.partial(expert_net_forward, use_bf16=True))
    out_bf16 = fwd_bf16(params, x)
    jax.block_until_ready(out_bf16)
    assert out_bf16.shape == (batch, seq, expert_dim), out_bf16.shape
    assert bool(jnp.all(jnp.isfinite(out_bf16)))
    assert bool(jnp.allclose(out_bf16, ref, atol=5e-2, rtol=5e-2)), \
        float(jnp.max(jnp.abs(out_bf16 - ref)))

    # TODO(synk): training-mode Dropout (p=0.1) would need pltpu.prng_seed /
    # prng_random_bits masks; eval-mode identity is implemented here.
    print("KERNEL_OK")
</pallas_src>

<mosaic_0001>
module attributes {stable_mosaic.version = 11 : i64} {
  func.func @_expert_net_kernel_resident(%arg0: i32, %arg1: memref<8x128xf32, #tpu.memory_space<vmem>>, %arg2: memref<128x64xf32, #tpu.memory_space<vmem>>, %arg3: memref<1x64xf32, #tpu.memory_space<vmem>>, %arg4: memref<64x128xf32, #tpu.memory_space<vmem>>, %arg5: memref<1x128xf32, #tpu.memory_space<vmem>>, %arg6: memref<8x128xf32, #tpu.memory_space<vmem>>) attributes {dimension_semantics = [#tpu.dimension_semantics<parallel>], iteration_bounds = array<i64: 2>, scalar_prefetch = 0 : i64, scratch_operands = 0 : i64, tpu.core_type = #tpu.core_type<tc>, window_params = [{transform_indices = @transform_0, window_bounds = array<i64: 8, 128>}, {pipeline_mode = #tpu.pipeline_mode<synchronous>, transform_indices = @transform_1, window_bounds = array<i64: 128, 64>}, {pipeline_mode = #tpu.pipeline_mode<synchronous>, transform_indices = @transform_2, window_bounds = array<i64: 1, 64>}, {pipeline_mode = #tpu.pipeline_mode<synchronous>, transform_indices = @transform_3, window_bounds = array<i64: 64, 128>}, {pipeline_mode = #tpu.pipeline_mode<synchronous>, transform_indices = @transform_4, window_bounds = array<i64: 1, 128>}, {transform_indices = @transform_5, window_bounds = array<i64: 8, 128>}]} {
    %c0 = arith.constant 0 : index
    %c0_0 = arith.constant 0 : index
    %0 = vector.load %arg1[%c0, %c0_0] : memref<8x128xf32, #tpu.memory_space<vmem>>, vector<8x128xf32>
    %c0_1 = arith.constant 0 : index
    %c0_2 = arith.constant 0 : index
    %1 = vector.load %arg2[%c0_1, %c0_2] : memref<128x64xf32, #tpu.memory_space<vmem>>, vector<128x64xf32>
    %cst = arith.constant dense<0.000000e+00> : vector<8x64xf32>
    %2 = tpu.matmul %0, %1, %cst {dimension_numbers = #tpu.dot_dimension_numbers<[1], [0], [0], [1], [0, 0, 1, 1], [], []>} : vector<8x128xf32>, vector<128x64xf32>, vector<8x64xf32> -> vector<8x64xf32>
    %c0_3 = arith.constant 0 : index
    %c0_4 = arith.constant 0 : index
    %3 = vector.load %arg3[%c0_3, %c0_4] : memref<1x64xf32, #tpu.memory_space<vmem>>, vector<1x64xf32>
    %4 = vector.broadcast %3 : vector<1x64xf32> to vector<8x64xf32>
    %5 = arith.addf %2, %4 : vector<8x64xf32>
    %cst_5 = arith.constant 0.000000e+00 : f32
    %6 = vector.broadcast %cst_5 : f32 to vector<8x64xf32>
    %7 = arith.maximumf %5, %6 : vector<8x64xf32>
    %c0_6 = arith.constant 0 : index
    %c0_7 = arith.constant 0 : index
    %8 = vector.load %arg4[%c0_6, %c0_7] : memref<64x128xf32, #tpu.memory_space<vmem>>, vector<64x128xf32>
    %cst_8 = arith.constant dense<0.000000e+00> : vector<8x128xf32>
    %9 = tpu.matmul %7, %8, %cst_8 {dimension_numbers = #tpu.dot_dimension_numbers<[1], [0], [0], [1], [0, 0, 1, 1], [], []>} : vector<8x64xf32>, vector<64x128xf32>, vector<8x128xf32> -> vector<8x128xf32>
    %c0_9 = arith.constant 0 : index
    %c0_10 = arith.constant 0 : index
    %10 = vector.load %arg5[%c0_9, %c0_10] : memref<1x128xf32, #tpu.memory_space<vmem>>, vector<1x128xf32>
    %11 = vector.broadcast %10 : vector<1x128xf32> to vector<8x128xf32>
    %12 = arith.addf %9, %11 : vector<8x128xf32>
    %cst_11 = arith.constant 0.000000e+00 : f32
    %13 = vector.broadcast %cst_11 : f32 to vector<8x128xf32>
    %14 = arith.maximumf %12, %13 : vector<8x128xf32>
    %c0_12 = arith.constant 0 : index
    %c0_13 = arith.constant 0 : index
    %15 = vector.load %arg6[%c0_12, %c0_13] : memref<8x128xf32, #tpu.memory_space<vmem>>, vector<8x128xf32>
    tpu.vector_store %arg6[%c0_12, %c0_13], %14 {strides = array<i32>} : memref<8x128xf32, #tpu.memory_space<vmem>>, vector<8x128xf32>,
    return
  }
  func.func @transform_0(%arg0: i32) -> (i32, i32) {
    %c0_i32 = arith.constant 0 : i32
    %c0_i32_0 = arith.constant 0 : i32
    return %arg0, %c0_i32 : i32, i32
  }
  func.func @transform_1(%arg0: i32) -> (i32, i32) {
    %c0_i32 = arith.constant 0 : i32
    %c0_i32_0 = arith.constant 0 : i32
    %c0_i32_1 = arith.constant 0 : i32
    return %c0_i32, %c0_i32_0 : i32, i32
  }
  func.func @transform_2(%arg0: i32) -> (i32, i32) {
    %c0_i32 = arith.constant 0 : i32
    %c0_i32_0 = arith.constant 0 : i32
    %c0_i32_1 = arith.constant 0 : i32
    return %c0_i32, %c0_i32_0 : i32, i32
  }
  func.func @transform_3(%arg0: i32) -> (i32, i32) {
    %c0_i32 = arith.constant 0 : i32
    %c0_i32_0 = arith.constant 0 : i32
    %c0_i32_1 = arith.constant 0 : i32
    return %c0_i32, %c0_i32_0 : i32, i32
  }
  func.func @transform_4(%arg0: i32) -> (i32, i32) {
    %c0_i32 = arith.constant 0 : i32
    %c0_i32_0 = arith.constant 0 : i32
    %c0_i32_1 = arith.constant 0 : i32
    return %c0_i32, %c0_i32_0 : i32, i32
  }
  func.func @transform_5(%arg0: i32) -> (i32, i32) {
    %c0_i32 = arith.constant 0 : i32
    %c0_i32_0 = arith.constant 0 : i32
    return %arg0, %c0_i32 : i32, i32
  }
}

</mosaic_0001>

<llo_original>
// kernel: expert_net_forward.1
$region0: #{expert_net_forward.1}
  #allocation0 [shape = 'u32[]', space=smem, size = 0x4, offset = 0x4, fixed_abs, tag = 'smem constant byte address 0x4 - core index']
  #allocation1 [shape = 'u32[144,128]{1,0:T(1,128)}', space=vmem, size = 0x12000, scoped, tag = 'internal scratch']
  %s0 = inlined_call_operand.vmem [shape: f32[16,128], index: 0, kind: input, shape index: {}]
  %s1 = inlined_call_operand.vmem [shape: f32[128,64], index: 1, kind: input, shape index: {}]
  %s2 = inlined_call_operand.vmem [shape: f32[1,64], index: 2, kind: input, shape index: {}]
  %s3 = inlined_call_operand.vmem [shape: f32[64,128], index: 3, kind: input, shape index: {}]
  %s4 = inlined_call_operand.vmem [shape: f32[1,128], index: 4, kind: input, shape index: {}]
  %s5 = inlined_call_operand.vmem [shape: f32[16,128], index: 5, kind: output, shape index: {}]
  %s6 = sld [smem:[#allocation0]]
  $region53: #{expert_net_forward.1} parent=0
    _
  %s8 = ssub.s32 1, %s6
  %s9 = scalar_select 0, %s8, %s6
  loop: start=0, step=1, limit=4
  $region2: #{expert_net_forward.1} parent=0 // loop_pre_header
    _
  $region3: #{expert_net_forward.1} parent=0 // loop_header
    %s11 = sphi 0, %s15
    %p12 = scmp.ge.s32.totalorder %s11, 4
    %s21 = sphi 0, %s23
    %s24 = sphi 0, %s21
    %s25 = sphi 0, %s24
    %s41 = sphi 0, %s25
    %s45 = sphi 0, %s45
    %s47 = sphi 0, %s45
    %s48 = sphi 0, %s47
    %s62 = sphi 0, %s48
    %s66 = sphi 0, %s66
    %s68 = sphi 0, %s66
    %s69 = sphi 0, %s68
    %s83 = sphi 0, %s69
    %s87 = sphi 0, %s87
    %s89 = sphi 0, %s87
    %s90 = sphi 0, %s89
    %s104 = sphi 0, %s90
    %s108 = sphi 0, %s108
    %s110 = sphi 0, %s108
    %s111 = sphi 0, %s110
    %s125 = sphi 0, %s111
    %s131 = sphi 0, %s133
    %s134 = sphi 0, %s131
    %s135 = sphi 0, %s134
    %s151 = sphi 0, %s135
  $region4: #{expert_net_forward.1} parent=0 // loop_header_branch
    %14 = sbr.rel (%p12) target = $region8
  $region5: #{expert_net_forward.1} parent=0 // loop_body
    %s16 = ssub.s32 %s11, 1
    %s17 = ssub.s32 %s11, 2
    %s18 = sadd.s32 %s11, 1
    %s19 = ssub.s32 %s11, %s18
    %p20 = scmp.eq.s32.totalorder %s19, 0
    %s22 = sadd.s32 %s21, 1
    %s23 = scalar_select %p20, %s21, %s22
    %p26 = pneg %p20
    %p27 = scmp.eq.s32.totalorder %s11, 1
    %p28 = por %p26, %p27
    %p29 = scmp.ne.s32.totalorder %s21, %s24
    %p30 = scmp.eq.s32.totalorder %s11, 0
    %p31 = por %p29, %p30
    %p32 = scmp.ne.s32.totalorder %s21, %s24
    %p33 = scmp.eq.s32.totalorder %s16, 1
    %p34 = por %p32, %p33
    %p35 = scmp.ne.s32.totalorder %s24, %s25
    %p36 = scmp.eq.s32.totalorder %s16, 0
    %p37 = por %p35, %p36
    %p38 = scmp.ne.s32.totalorder %s24, %s25
    %p39 = scmp.eq.s32.totalorder %s17, 1
    %p40 = por %p38, %p39
    %p42 = scmp.ne.s32.totalorder %s25, %s41
    %p43 = scmp.eq.s32.totalorder %s17, 0
    %p44 = por %p42, %p43
    %s46 = sadd.s32 %s45, 1
    %p49 = scmp.eq.s32.totalorder %s11, 1
    %p50 = scmp.ne.s32.totalorder %s45, %s47
    %p51 = scmp.eq.s32.totalorder %s11, 0
    %p52 = por %p50, %p51
    %p53 = scmp.ne.s32.totalorder %s45, %s47
    %p54 = scmp.eq.s32.totalorder %s16, 1
    %p55 = por %p53, %p54
    %p56 = scmp.ne.s32.totalorder %s47, %s48
    %p57 = scmp.eq.s32.totalorder %s16, 0
    %p58 = por %p56, %p57
    %p59 = scmp.ne.s32.totalorder %s47, %s48
    %p60 = scmp.eq.s32.totalorder %s17, 1
    %p61 = por %p59, %p60
    %p63 = scmp.ne.s32.totalorder %s48, %s62
    %p64 = scmp.eq.s32.totalorder %s17, 0
    %p65 = por %p63, %p64
    %s67 = sadd.s32 %s66, 1
    %p70 = scmp.eq.s32.totalorder %s11, 1
    %p71 = scmp.ne.s32.totalorder %s66, %s68
    %p72 = scmp.eq.s32.totalorder %s11, 0
    %p73 = por %p71, %p72
    %p74 = scmp.ne.s32.totalorder %s66, %s68
    %p75 = scmp.eq.s32.totalorder %s16, 1
    %p76 = por %p74, %p75
    %p77 = scmp.ne.s32.totalorder %s68, %s69
    %p78 = scmp.eq.s32.totalorder %s16, 0
    %p79 = por %p77, %p78
    %p80 = scmp.ne.s32.totalorder %s68, %s69
    %p81 = scmp.eq.s32.totalorder %s17, 1
    %p82 = por %p80, %p81
    %p84 = scmp.ne.s32.totalorder %s69, %s83
    %p85 = scmp.eq.s32.totalorder %s17, 0
    %p86 = por %p84, %p85
    %s88 = sadd.s32 %s87, 1
    %p91 = scmp.eq.s32.totalorder %s11, 1
    %p92 = scmp.ne.s32.totalorder %s87, %s89
    %p93 = scmp.eq.s32.totalorder %s11, 0
    %p94 = por %p92, %p93
    %p95 = scmp.ne.s32.totalorder %s87, %s89
    %p96 = scmp.eq.s32.totalorder %s16, 1
    %p97 = por %p95, %p96
    %p98 = scmp.ne.s32.totalorder %s89, %s90
    %p99 = scmp.eq.s32.totalorder %s16, 0
    %p100 = por %p98, %p99
    %p101 = scmp.ne.s32.totalorder %s89, %s90
    %p102 = scmp.eq.s32.totalorder %s17, 1
    %p103 = por %p101, %p102
    %p105 = scmp.ne.s32.totalorder %s90, %s104
    %p106 = scmp.eq.s32.totalorder %s17, 0
    %p107 = por %p105, %p106
    %s109 = sadd.s32 %s108, 1
    %p112 = scmp.eq.s32.totalorder %s11, 1
    %p113 = scmp.ne.s32.totalorder %s108, %s110
    %p114 = scmp.eq.s32.totalorder %s11, 0
    %p115 = por %p113, %p114
    %p116 = scmp.ne.s32.totalorder %s108, %s110
    %p117 = scmp.eq.s32.totalorder %s16, 1
    %p118 = por %p116, %p117
    %p119 = scmp.ne.s32.totalorder %s110, %s111
    %p120 = scmp.eq.s32.totalorder %s16, 0
    %p121 = por %p119, %p120
    %p122 = scmp.ne.s32.totalorder %s110, %s111
    %p123 = scmp.eq.s32.totalorder %s17, 1
    %p124 = por %p122, %p123
    %p126 = scmp.ne.s32.totalorder %s111, %s125
    %p127 = scmp.eq.s32.totalorder %s17, 0
    %p128 = por %p126, %p127
    %s129 = ssub.s32 %s11, %s18
    %p130 = scmp.eq.s32.totalorder %s129, 0
    %s132 = sadd.s32 %s131, 1
    %s133 = scalar_select %p130, %s131, %s132
    %p136 = pneg %p130
    %p137 = scmp.eq.s32.totalorder %s11, 1
    %p138 = por %p136, %p137
    %p139 = scmp.ne.s32.totalorder %s131, %s134
    %p140 = scmp.eq.s32.totalorder %s11, 0
    %p141 = por %p139, %p140
    %p142 = scmp.ne.s32.totalorder %s131, %s134
    %p143 = scmp.eq.s32.totalorder %s16, 1
    %p144 = por %p142, %p143
    %p145 = scmp.ne.s32.totalorder %s134, %s135
    %p146 = scmp.eq.s32.totalorder %s16, 0
    %p147 = por %p145, %p146
    %p148 = scmp.ne.s32.totalorder %s134, %s135
    %p149 = scmp.eq.s32.totalorder %s17, 1
    %p150 = por %p148, %p149
    %p152 = scmp.ne.s32.totalorder %s135, %s151
    %p153 = scmp.eq.s32.totalorder %s17, 0
    %p154 = por %p152, %p153
    %p155 = scmp.le.s32.totalorder 1, %s11
    %p156 = scmp.lt.s32.totalorder %s11, 3
    %p157 = pnand %p155, %p156
    %p158 = pneg %p157
    // Predicated region
    $region9: #{expert_net_forward.1} parent=5 // pred_check
      _
    $region10: #{expert_net_forward.1} parent=5 // pred_check_branch
      %160 = sbr.rel (%p157) target = $region12
    $region11: #{expert_net_forward.1} parent=5 // pred_region
      %s161 = ssub.s32 %s11, 1
      // Predicated region
      $region13: #{expert_net_forward.1} parent=11 // pred_check
        %p162 = pneg %p58
      $region14: #{expert_net_forward.1} parent=11 // pred_check_branch
        %164 = sbr.rel (%p162) target = $region16
      $region15: #{expert_net_forward.1} parent=11 // pred_region
        _
      $region16: #{expert_net_forward.1} parent=11 // pred_fallthru
        _
      // Predicated region
      $region17: #{expert_net_forward.1} parent=11 // pred_check
        %p165 = pneg %p79
      $region18: #{expert_net_forward.1} parent=11 // pred_check_branch
        %167 = sbr.rel (%p165) target = $region20
      $region19: #{expert_net_forward.1} parent=11 // pred_region
        _
      $region20: #{expert_net_forward.1} parent=11 // pred_fallthru
        _
      // Predicated region
      $region21: #{expert_net_forward.1} parent=11 // pred_check
        %p168 = pneg %p100
      $region22: #{expert_net_forward.1} parent=11 // pred_check_branch
        %170 = sbr.rel (%p168) target = $region24
      $region23: #{expert_net_forward.1} parent=11 // pred_region
        _
      $region24: #{expert_net_forward.1} parent=11 // pred_fallthru
        _
      // Predicated region
      $region25: #{expert_net_forward.1} parent=11 // pred_check
        %p171 = pneg %p121
      $region26: #{expert_net_forward.1} parent=11 // pred_check_branch
        %173 = sbr.rel (%p171) target = $region28
      $region27: #{expert_net_forward.1} parent=11 // pred_region
        _
      $region28: #{expert_net_forward.1} parent=11 // pred_fallthru
        _
    $region12: #{expert_net_forward.1} parent=5 // pred_fallthru
      _
    %p174 = scmp.lt.s32.totalorder %s11, 2
    // Predicated region
    $region29: #{expert_net_forward.1} parent=5 // pred_check
      %p175 = pneg %p174
    $region30: #{expert_net_forward.1} parent=5 // pred_check_branch
      %177 = sbr.rel (%p175) target = $region32
    $region31: #{expert_net_forward.1} parent=5 // pred_region
      // Predicated region
      $region33: #{expert_net_forward.1} parent=31 // pred_check
        %p178 = pneg %p31
      $region34: #{expert_net_forward.1} parent=31 // pred_check_branch
        %180 = sbr.rel (%p178) target = $region36
      $region35: #{expert_net_forward.1} parent=31 // pred_region
        %p181 = scmp.lt.s32.totalorder %s11, 1
        %s182 = scalar_select %p181, %s11, 1
        %s183 = smul.addr %s182, 8
        %s184 = scalar_lea.vmem %s0, %s183
      $region36: #{expert_net_forward.1} parent=31 // pred_fallthru
        _
    $region32: #{expert_net_forward.1} parent=5 // pred_fallthru
      _
    %p185 = scmp.le.s32.totalorder 1, %s11
    %p186 = scmp.lt.s32.totalorder %s11, 3
    %p187 = pnand %p185, %p186
    %p188 = pneg %p187
    // Predicated region
    $region37: #{expert_net_forward.1} parent=5 // pred_check
      _
    $region38: #{expert_net_forward.1} parent=5 // pred_check_branch
      %190 = sbr.rel (%p187) target = $region40
    $region39: #{expert_net_forward.1} parent=5 // pred_region
      %s191 = ssub.s32 %s11, 1
      %p192 = scmp.lt.s32.totalorder %s16, 1
      %s193 = scalar_select %p192, %s16, 1
      %s194 = smul.addr %s193, 8
      %s195 = scalar_lea.vmem %s0, %s194
      %p196 = pneg %p37
      %p197 = pneg %p34
      %p198 = pneg %p58
      %p199 = pneg %p55
      %p200 = pneg %p79
      %p201 = pneg %p76
      %p202 = pneg %p100
      %p203 = pneg %p97
      %p204 = pneg %p121
      %p205 = pneg %p118
      %p206 = pneg %p147
      %p207 = pneg %p144
      %p208 = scmp.lt.s32.totalorder %s16, 1
      %s209 = scalar_select %p208, %s16, 1
      %s210 = smul.addr %s209, 8
      %s211 = scalar_lea.vmem %s5, %s210
      %p212 = scmp.lt.s32.totalorder %s16, 1
      %s213 = scalar_select %p212, %s16, 1
      %s214 = smul.addr %s213, 8
      %s215 = scalar_lea.vmem %s0, %s214
      %p216 = scmp.lt.s32.totalorder %s16, 1
      %s217 = scalar_select %p216, %s16, 1
      %s218 = smul.addr %s217, 8
      %s219 = scalar_lea.vmem %s5, %s218
      %v220 = vld [vmem:[%s215] sm:$0xff]
      %v221 = vld [vmem:[%s1] sm:$0xff]
      %v222 = vld [vmem:[%s1 + $0x8] sm:$0xff]
      %v223 = vld [vmem:[%s1 + $0x10] sm:$0xff]
      %v224 = vld [vmem:[%s1 + $0x18] sm:$0xff]
      %v225 = vld [vmem:[%s1 + $0x20] sm:$0xff]
      %v226 = vld [vmem:[%s1 + $0x28] sm:$0xff]
      %v227 = vld [vmem:[%s1 + $0x30] sm:$0xff]
      %v228 = vld [vmem:[%s1 + $0x38] sm:$0xff]
      %v229 = vld [vmem:[%s1 + $0x40] sm:$0xff]
      %v230 = vld [vmem:[%s1 + $0x48] sm:$0xff]
      %v231 = vld [vmem:[%s1 + $0x50] sm:$0xff]
      %v232 = vld [vmem:[%s1 + $0x58] sm:$0xff]
      %v233 = vld [vmem:[%s1 + $0x60] sm:$0xff]
      %v234 = vld [vmem:[%s1 + $0x68] sm:$0xff]
      %v235 = vld [vmem:[%s1 + $0x70] sm:$0xff]
      %v236 = vld [vmem:[%s1 + $0x78] sm:$0xff]
      %v237 = vld [vmem:[%s2] sm:$0x1]
      %v239 = vlaneseq
      %v240 = vshrl.u32 %v239, 7
      %v241 = vsub.s32 0, %v240
      %v242 = vrot.slane %v237, %v241
      %244 = vmatprep.subr.mxu0 0.0
      %245 = vmatpush1.msra.mxu0 %v236
      %246 = vmatprep.subr.mxu0 0.0
      %247 = vmatpush1.msra.mxu0 %v235
      %248 = vmatprep.subr.mxu0 0.0
      %249 = vmatpush1.msra.mxu0 %v234
      %250 = vmatprep.subr.mxu0 0.0
      %251 = vmatpush1.msra.mxu0 %v233
      %252 = vmatprep.subr.mxu0 0.0
      %253 = vmatpush1.msra.mxu0 %v232
      %254 = vmatprep.subr.mxu0 0.0
      %255 = vmatpush1.msra.mxu0 %v231
      %256 = vmatprep.subr.mxu0 0.0
      %257 = vmatpush1.msra.mxu0 %v230
      %258 = vmatprep.subr.mxu0 0.0
      %259 = vmatpush1.msra.mxu0 %v229
      %260 = vmatprep.subr.mxu0 0.0
      %261 = vmatpush1.msra.mxu0 %v228
      %262 = vmatprep.subr.mxu0 0.0
      %263 = vmatpush1.msra.mxu0 %v227
      %264 = vmatprep.subr.mxu0 0.0
      %265 = vmatpush1.msra.mxu0 %v226
      %266 = vmatprep.subr.mxu0 0.0
      %267 = vmatpush1.msra.mxu0 %v225
      %268 = vmatprep.subr.mxu0 0.0
      %269 = vmatpush1.msra.mxu0 %v224
      %270 = vmatprep.subr.mxu0 0.0
      %271 = vmatpush1.msra.mxu0 %v223
      %272 = vmatprep.subr.mxu0 0.0
      %273 = vmatpush1.msra.mxu0 %v222
      %274 = vmatprep.subr.mxu0 0.0
      %275 = vmatpush1.msra.mxu0 %v221
      %276 = vmatprep.subr.mxu0 0.0
      %277 = vmatpush2.msra.mxu0 0.0
      %278 = vmatprep.subr.mxu0 0.0
      %279 = vmatpush2.msra.mxu0 0.0
      %280 = vmatprep.subr.mxu0 0.0
      %281 = vmatpush2.msra.mxu0 0.0
      %282 = vmatprep.subr.mxu0 0.0
      %283 = vmatpush2.msra.mxu0 0.0
      %284 = vmatprep.subr.mxu0 0.0
      %285 = vmatpush2.msra.mxu0 0.0
      %286 = vmatprep.subr.mxu0 0.0
      %287 = vmatpush2.msra.mxu0 0.0
      %288 = vmatprep.subr.mxu0 0.0
      %289 = vmatpush2.msra.mxu0 0.0
      %290 = vmatprep.subr.mxu0 0.0
      %291 = vmatpush2.msra.mxu0 0.0
      %292 = vmatprep.subr.mxu0 0.0
      %293 = vmatpush2.msra.mxu0 0.0
      %294 = vmatprep.subr.mxu0 0.0
      %295 = vmatpush2.msra.mxu0 0.0
      %296 = vmatprep.subr.mxu0 0.0
      %297 = vmatpush2.msra.mxu0 0.0
      %298 = vmatprep.subr.mxu0 0.0
      %299 = vmatpush2.msra.mxu0 0.0
      %300 = vmatprep.subr.mxu0 0.0
      %301 = vmatpush2.msra.mxu0 0.0
      %302 = vmatprep.subr.mxu0 0.0
      %303 = vmatpush2.msra.mxu0 0.0
      %304 = vmatprep.subr.mxu0 0.0
      %305 = vmatpush2.msra.mxu0 0.0
      %306 = vmatprep.subr.mxu0 0.0
      %307 = vmatpush2.msra.mxu0 0.0
      %308 = vmatprep.mubr.f32.mxu0 0.0
      %309 = vmatmul.mubr.f32.gmra.mxu0 %v220
      %v310 = vpop.f32.mrf.mxu0
      %v311 = vadd.f32 %v242, %v310
      %v312 = vpop.f32.mrf.mxu0
      %313 = vdwg.mxu0
      %v314 = vmax.f32 %v311, 0.0
      %v315 = vld [vmem:[%s3] sm:$0xff]
      %v316 = vld [vmem:[%s3 + $0x8] sm:$0xff]
      %v317 = vld [vmem:[%s3 + $0x10] sm:$0xff]
      %v318 = vld [vmem:[%s3 + $0x18] sm:$0xff]
      %v319 = vld [vmem:[%s3 + $0x20] sm:$0xff]
      %v320 = vld [vmem:[%s3 + $0x28] sm:$0xff]
      %v321 = vld [vmem:[%s3 + $0x30] sm:$0xff]
      %v322 = vld [vmem:[%s3 + $0x38] sm:$0xff]
      %v323 = vld [vmem:[%s4] sm:$0x1]
      %v325 = vlaneseq
      %v326 = vshrl.u32 %v325, 7
      %v327 = vsub.s32 0, %v326
      %v328 = vrot.slane %v323, %v327
      %vm330 = vcmask 523264
      %v332 = vsel %vm330, %v314, 0
      %334 = vmatprep.subr.mxu0 0.0
      %335 = vmatpush1.msra.mxu0 0.0
      %336 = vmatprep.subr.mxu0 0.0
      %337 = vmatpush1.msra.mxu0 0.0
      %338 = vmatprep.subr.mxu0 0.0
      %339 = vmatpush1.msra.mxu0 0.0
      %340 = vmatprep.subr.mxu0 0.0
      %341 = vmatpush1.msra.mxu0 0.0
      %342 = vmatprep.subr.mxu0 0.0
      %343 = vmatpush1.msra.mxu0 0.0
      %344 = vmatprep.subr.mxu0 0.0
      %345 = vmatpush1.msra.mxu0 0.0
      %346 = vmatprep.subr.mxu0 0.0
      %347 = vmatpush1.msra.mxu0 0.0
      %348 = vmatprep.subr.mxu0 0.0
      %349 = vmatpush1.msra.mxu0 0.0
      %350 = vmatprep.subr.mxu0 0.0
      %351 = vmatpush1.msra.mxu0 %v322
      %352 = vmatprep.subr.mxu0 0.0
      %353 = vmatpush1.msra.mxu0 %v321
      %354 = vmatprep.subr.mxu0 0.0
      %355 = vmatpush1.msra.mxu0 %v320
      %356 = vmatprep.subr.mxu0 0.0
      %357 = vmatpush1.msra.mxu0 %v319
      %358 = vmatprep.subr.mxu0 0.0
      %359 = vmatpush1.msra.mxu0 %v318
      %360 = vmatprep.subr.mxu0 0.0
      %361 = vmatpush1.msra.mxu0 %v317
      %362 = vmatprep.subr.mxu0 0.0
      %363 = vmatpush1.msra.mxu0 %v316
      %364 = vmatprep.subr.mxu0 0.0
      %365 = vmatpush1.msra.mxu0 %v315
      %366 = vmatprep.subr.mxu0 0.0
      %367 = vmatpush2.msra.mxu0 0.0
      %368 = vmatprep.subr.mxu0 0.0
      %369 = vmatpush2.msra.mxu0 0.0
      %370 = vmatprep.subr.mxu0 0.0
      %371 = vmatpush2.msra.mxu0 0.0
      %372 = vmatprep.subr.mxu0 0.0
      %373 = vmatpush2.msra.mxu0 0.0
      %374 = vmatprep.subr.mxu0 0.0
      %375 = vmatpush2.msra.mxu0 0.0
      %376 = vmatprep.subr.mxu0 0.0
      %377 = vmatpush2.msra.mxu0 0.0
      %378 = vmatprep.subr.mxu0 0.0
      %379 = vmatpush2.msra.mxu0 0.0
      %380 = vmatprep.subr.mxu0 0.0
      %381 = vmatpush2.msra.mxu0 0.0
      %382 = vmatprep.subr.mxu0 0.0
      %383 = vmatpush2.msra.mxu0 0.0
      %384 = vmatprep.subr.mxu0 0.0
      %385 = vmatpush2.msra.mxu0 0.0
      %386 = vmatprep.subr.mxu0 0.0
      %387 = vmatpush2.msra.mxu0 0.0
      %388 = vmatprep.subr.mxu0 0.0
      %389 = vmatpush2.msra.mxu0 0.0
      %390 = vmatprep.subr.mxu0 0.0
      %391 = vmatpush2.msra.mxu0 0.0
      %392 = vmatprep.subr.mxu0 0.0
      %393 = vmatpush2.msra.mxu0 0.0
      %394 = vmatprep.subr.mxu0 0.0
      %395 = vmatpush2.msra.mxu0 0.0
      %396 = vmatprep.subr.mxu0 0.0
      %397 = vmatpush2.msra.mxu0 0.0
      %398 = vmatprep.mubr.f32.mxu0 0.0
      %399 = vmatmul.mubr.f32.gmra.mxu0 %v332
      %v400 = vpop.f32.mrf.mxu0
      %v401 = vadd.f32 %v328, %v400
      %v402 = vpop.f32.mrf.mxu0
      %403 = vdwg.mxu0
      %v404 = vmax.f32 %v401, 0.0
      %405 = vst [vmem:[%s219] sm:$0xff] %v404
      %p406 = scmp.lt.s32.totalorder %s16, 1
      %s407 = scalar_select %p406, %s16, 1
      %s408 = smul.addr %s407, 8
      %s409 = scalar_lea.vmem %s5, %s408
      // Predicated region
      $region41: #{expert_net_forward.1} parent=39 // pred_check
        %p410 = pneg %p144
      $region42: #{expert_net_forward.1} parent=39 // pred_check_branch
        %412 = sbr.rel (%p410) target = $region44
      $region43: #{expert_net_forward.1} parent=39 // pred_region
        _
      $region44: #{expert_net_forward.1} parent=39 // pred_fallthru
        _
    $region40: #{expert_net_forward.1} parent=5 // pred_fallthru
      _
    %p413 = scmp.le.s32.totalorder 2, %s11
    // Predicated region
    $region45: #{expert_net_forward.1} parent=5 // pred_check
      %p414 = pneg %p413
    $region46: #{expert_net_forward.1} parent=5 // pred_check_branch
      %416 = sbr.rel (%p414) target = $region48
    $region47: #{expert_net_forward.1} parent=5 // pred_region
      %s417 = ssub.s32 %s11, 2
      // Predicated region
      $region49: #{expert_net_forward.1} parent=47 // pred_check
        %p418 = pneg %p150
      $region50: #{expert_net_forward.1} parent=47 // pred_check_branch
        %420 = sbr.rel (%p418) target = $region52
      $region51: #{expert_net_forward.1} parent=47 // pred_region
        %p421 = scmp.lt.s32.totalorder %s17, 1
        %s422 = scalar_select %p421, %s17, 1
        %s423 = smul.addr %s422, 8
        %s424 = scalar_lea.vmem %s5, %s423
      $region52: #{expert_net_forward.1} parent=47 // pred_fallthru
        _
    $region48: #{expert_net_forward.1} parent=5 // pred_fallthru
      _
  $region6: #{expert_net_forward.1} parent=0 // loop_footer
    %s15 = sadd.s32 1, %s11
  $region7: #{expert_net_forward.1} parent=0 // loop_footer_branch
    %10 = sbr.rel target = $region3
  $region8: #{expert_net_forward.1} parent=0 // loop_exit
    _

</llo_original>
